<compile_context>
chip_gen: v7x
topology: tpu7x:2x2x1
jax: 0.10.0
libtpu: 0.0.40
codegen_flags: <defaults>
</compile_context>

<pallas_src>
import functools

import jax
import jax.numpy as jnp
from jax.experimental import pallas as pl
from jax.experimental.pallas import tpu as pltpu


def _cdiv(a: int, b: int) -> int:
    return (a + b - 1) // b


def _round_up(x: int, m: int) -> int:
    return _cdiv(x, m) * m


def _mlp_kernel(x_ref, *refs, n_layers: int):
    """One batch tile through the whole MLP; activations never leave VMEM.

    x_ref : (bm, D0) bf16
    refs  : (w0, b0, ..., w_{n-1}, b_{n-1}, o_ref)
            w_i (D_i, D_{i+1}) bf16 ; b_i (1, D_{i+1}) f32
    o_ref : (bm, D_n) f32
    """
    o_ref = refs[-1]
    wb = refs[:-1]

    h = x_ref[...]                                  # bf16, straight to MXU
    for i in range(n_layers):
        w = wb[2 * i][...]                          # bf16
        b = wb[2 * i + 1][...]                      # f32
        y = jnp.dot(h, w, preferred_element_type=jnp.float32) + b
        if i < n_layers - 1:
            h = jnp.tanh(y).astype(jnp.bfloat16)    # f32 tanh (EUP), bf16 carry
        else:
            h = y                                   # last layer: f32 out
    o_ref[...] = h.astype(o_ref.dtype)


def prepare_mlp_params(params):
    """One-time conversion: weight (in,out) -> bf16, bias -> (1,out) f32."""
    prepared = []
    for w_t, b in params:
        prepared.append((jnp.asarray(w_t, jnp.bfloat16),
                         jnp.asarray(b, jnp.float32).reshape(1, -1)))
    return prepared


@functools.partial(jax.jit, static_argnames=("bm_max",))
def mlp_forward(x, prepared_params, *, bm_max: int = 512):
    """Fused Pallas forward. x: (B, D0) f32; prepared_params from prepare_mlp_params."""
    B, D0 = x.shape
    n = len(prepared_params)
    d_out = prepared_params[-1][0].shape[1]

    # ---- batch tiling: minimal padding; >=2 grid steps when B is large ----
    n_tiles = _cdiv(B, bm_max)
    if B >= 256:                      # enough work to split across v7x's 2 TCs
        n_tiles = max(n_tiles, 2)
    bm = _round_up(_cdiv(B, n_tiles), 16)   # 16 = bf16 sublane-tile multiple
    if bm >= B:
        bm = B                        # single full-extent block (always legal)
    grid = _cdiv(B, bm)               # ragged edge block is masked by Pallas

    x_bf16 = x.astype(jnp.bfloat16)

    flat_inputs = [x_bf16]
    in_specs = [pl.BlockSpec((bm, D0), lambda i: (i, 0))]
    for w, b in prepared_params:
        din, dout = w.shape
        flat_inputs += [w, b]
        # Constant index_map -> Pallas keeps these blocks resident across the
        # grid (no re-DMA).  For multi-MiB weights, add
        # pipeline_mode=pl.Buffered(1) here to drop the unused second buffer.
        in_specs += [pl.BlockSpec((din, dout), lambda i: (0, 0)),
                     pl.BlockSpec((1, dout), lambda i: (0, 0))]

    # Explicit VMEM budget: resident weights + double-buffered x/out tiles.
    weight_bytes = sum(w.size * 2 + b.size * 4 for w, b in prepared_params)
    tile_bytes = bm * (D0 * 2 + d_out * 4)
    vmem_limit = min(max(2 * (weight_bytes + tile_bytes) + (8 << 20), 32 << 20),
                     64 << 20)        # stays under v7x's 64 MiB physical VMEM

    return pl.pallas_call(
        functools.partial(_mlp_kernel, n_layers=n),
        out_shape=jax.ShapeDtypeStruct((B, d_out), jnp.float32),
        grid=(grid,),
        in_specs=in_specs,
        out_specs=pl.BlockSpec((bm, d_out), lambda i: (i, 0)),
        compiler_params=pltpu.CompilerParams(
            dimension_semantics=("parallel",),
            vmem_limit_bytes=vmem_limit),
    )(*flat_inputs)


def init_mlp_params(key, sizes, dtype=jnp.float32):
    """Mirror nn.Linear init; store weight transposed as (in, out)."""
    params = []
    for i in range(len(sizes) - 1):
        key, kw, kb = jax.random.split(key, 3)
        bound = 1.0 / jnp.sqrt(jnp.asarray(sizes[i], dtype))
        w = jax.random.uniform(
            kw, (sizes[i + 1], sizes[i]), dtype, minval=-bound, maxval=bound)
        b = jax.random.uniform(
            kb, (1, sizes[i + 1]), dtype, minval=-bound, maxval=bound)
        params.append((w.T, b))
    return params


def mlp_reference(x, params):
    n = len(params)
    for i, (w_t, b) in enumerate(params):
        x = x @ w_t + b
        if i < n - 1:
            x = jnp.tanh(x)
    return x


if __name__ == "__main__":
    key = jax.random.PRNGKey(0)
    sizes = (32, 64, 48, 16)              # MLP(sizes=(32, 64, 48, 16))
    kx, kp = jax.random.split(key)
    params = init_mlp_params(kp, sizes)   # f32 reference params
    kparams = prepare_mlp_params(params)  # bf16/f32 kernel params (cast ONCE)

    # Small demo batch (matches the original module usage).
    B = 8
    x = jax.random.normal(kx, (B, sizes[0]), jnp.float32)
    out = jax.block_until_ready(mlp_forward(x, kparams))
    ref = mlp_reference(x, params)
    assert out.shape == (B, sizes[-1])
    # bf16 weights/activations with f32 accumulation -> relaxed tolerance.
    assert jnp.allclose(out, ref, atol=5e-2, rtol=5e-2), "mismatch vs reference"

    # Multi-step parallel grid + ragged (masked) edge block, no HBM padding copy.
    B2 = 520
    x2 = jax.random.normal(kx, (B2, sizes[0]), jnp.float32)
    out2 = jax.block_until_ready(mlp_forward(x2, kparams))
    ref2 = mlp_reference(x2, params)
    assert out2.shape == (B2, sizes[-1])
    assert jnp.allclose(out2, ref2, atol=5e-2, rtol=5e-2), "mismatch (ragged batch)"

    print("KERNEL_OK")
</pallas_src>

<mosaic_0001>
module attributes {stable_mosaic.version = 11 : i64} {
  func.func @_mlp_kernel(%arg0: i32, %arg1: memref<8x32xbf16, #tpu.memory_space<vmem>>, %arg2: memref<32x64xbf16, #tpu.memory_space<vmem>>, %arg3: memref<1x64xf32, #tpu.memory_space<vmem>>, %arg4: memref<64x48xbf16, #tpu.memory_space<vmem>>, %arg5: memref<1x48xf32, #tpu.memory_space<vmem>>, %arg6: memref<48x16xbf16, #tpu.memory_space<vmem>>, %arg7: memref<1x16xf32, #tpu.memory_space<vmem>>, %arg8: memref<8x16xf32, #tpu.memory_space<vmem>>) attributes {dimension_semantics = [#tpu.dimension_semantics<parallel>], iteration_bounds = array<i64: 1>, scalar_prefetch = 0 : i64, scratch_operands = 0 : i64, tpu.core_type = #tpu.core_type<tc>, window_params = [{transform_indices = @transform_0, window_bounds = array<i64: 8, 32>}, {pipeline_mode = #tpu.pipeline_mode<synchronous>, transform_indices = @transform_1, window_bounds = array<i64: 32, 64>}, {pipeline_mode = #tpu.pipeline_mode<synchronous>, transform_indices = @transform_2, window_bounds = array<i64: 1, 64>}, {pipeline_mode = #tpu.pipeline_mode<synchronous>, transform_indices = @transform_3, window_bounds = array<i64: 64, 48>}, {pipeline_mode = #tpu.pipeline_mode<synchronous>, transform_indices = @transform_4, window_bounds = array<i64: 1, 48>}, {pipeline_mode = #tpu.pipeline_mode<synchronous>, transform_indices = @transform_5, window_bounds = array<i64: 48, 16>}, {pipeline_mode = #tpu.pipeline_mode<synchronous>, transform_indices = @transform_6, window_bounds = array<i64: 1, 16>}, {transform_indices = @transform_7, window_bounds = array<i64: 8, 16>}]} {
    %c0 = arith.constant 0 : index
    %c0_0 = arith.constant 0 : index
    %0 = vector.load %arg1[%c0, %c0_0] : memref<8x32xbf16, #tpu.memory_space<vmem>>, vector<8x32xbf16>
    %c0_1 = arith.constant 0 : index
    %c0_2 = arith.constant 0 : index
    %1 = vector.load %arg2[%c0_1, %c0_2] : memref<32x64xbf16, #tpu.memory_space<vmem>>, vector<32x64xbf16>
    %c0_3 = arith.constant 0 : index
    %c0_4 = arith.constant 0 : index
    %2 = vector.load %arg3[%c0_3, %c0_4] : memref<1x64xf32, #tpu.memory_space<vmem>>, vector<1x64xf32>
    %cst = arith.constant dense<0.000000e+00> : vector<8x64xf32>
    %3 = tpu.matmul %0, %1, %cst {dimension_numbers = #tpu.dot_dimension_numbers<[1], [0], [0], [1], [0, 0, 1, 1], [], []>} : vector<8x32xbf16>, vector<32x64xbf16>, vector<8x64xf32> -> vector<8x64xf32>
    %4 = vector.broadcast %2 : vector<1x64xf32> to vector<8x64xf32>
    %5 = arith.addf %3, %4 : vector<8x64xf32>
    %6 = math.tanh %5 : vector<8x64xf32>
    %7 = arith.truncf %6 : vector<8x64xf32> to vector<8x64xbf16>
    %c0_5 = arith.constant 0 : index
    %c0_6 = arith.constant 0 : index
    %8 = vector.load %arg4[%c0_5, %c0_6] : memref<64x48xbf16, #tpu.memory_space<vmem>>, vector<64x48xbf16>
    %c0_7 = arith.constant 0 : index
    %c0_8 = arith.constant 0 : index
    %9 = vector.load %arg5[%c0_7, %c0_8] : memref<1x48xf32, #tpu.memory_space<vmem>>, vector<1x48xf32>
    %cst_9 = arith.constant dense<0.000000e+00> : vector<8x48xf32>
    %10 = tpu.matmul %7, %8, %cst_9 {dimension_numbers = #tpu.dot_dimension_numbers<[1], [0], [0], [1], [0, 0, 1, 1], [], []>} : vector<8x64xbf16>, vector<64x48xbf16>, vector<8x48xf32> -> vector<8x48xf32>
    %11 = vector.broadcast %9 : vector<1x48xf32> to vector<8x48xf32>
    %12 = arith.addf %10, %11 : vector<8x48xf32>
    %13 = math.tanh %12 : vector<8x48xf32>
    %14 = arith.truncf %13 : vector<8x48xf32> to vector<8x48xbf16>
    %c0_10 = arith.constant 0 : index
    %c0_11 = arith.constant 0 : index
    %15 = vector.load %arg6[%c0_10, %c0_11] : memref<48x16xbf16, #tpu.memory_space<vmem>>, vector<48x16xbf16>
    %c0_12 = arith.constant 0 : index
    %c0_13 = arith.constant 0 : index
    %16 = vector.load %arg7[%c0_12, %c0_13] : memref<1x16xf32, #tpu.memory_space<vmem>>, vector<1x16xf32>
    %cst_14 = arith.constant dense<0.000000e+00> : vector<8x16xf32>
    %17 = tpu.matmul %14, %15, %cst_14 {dimension_numbers = #tpu.dot_dimension_numbers<[1], [0], [0], [1], [0, 0, 1, 1], [], []>} : vector<8x48xbf16>, vector<48x16xbf16>, vector<8x16xf32> -> vector<8x16xf32>
    %18 = vector.broadcast %16 : vector<1x16xf32> to vector<8x16xf32>
    %19 = arith.addf %17, %18 : vector<8x16xf32>
    %c0_15 = arith.constant 0 : index
    %c0_16 = arith.constant 0 : index
    %20 = vector.load %arg8[%c0_15, %c0_16] : memref<8x16xf32, #tpu.memory_space<vmem>>, vector<8x16xf32>
    tpu.vector_store %arg8[%c0_15, %c0_16], %19 {strides = array<i32>} : memref<8x16xf32, #tpu.memory_space<vmem>>, vector<8x16xf32>,
    return
  }
  func.func @transform_0(%arg0: i32) -> (i32, i32) {
    %c0_i32 = arith.constant 0 : i32
    %c0_i32_0 = arith.constant 0 : i32
    return %arg0, %c0_i32 : i32, i32
  }
  func.func @transform_1(%arg0: i32) -> (i32, i32) {
    %c0_i32 = arith.constant 0 : i32
    %c0_i32_0 = arith.constant 0 : i32
    %c0_i32_1 = arith.constant 0 : i32
    return %c0_i32, %c0_i32_0 : i32, i32
  }
  func.func @transform_2(%arg0: i32) -> (i32, i32) {
    %c0_i32 = arith.constant 0 : i32
    %c0_i32_0 = arith.constant 0 : i32
    %c0_i32_1 = arith.constant 0 : i32
    return %c0_i32, %c0_i32_0 : i32, i32
  }
  func.func @transform_3(%arg0: i32) -> (i32, i32) {
    %c0_i32 = arith.constant 0 : i32
    %c0_i32_0 = arith.constant 0 : i32
    %c0_i32_1 = arith.constant 0 : i32
    return %c0_i32, %c0_i32_0 : i32, i32
  }
  func.func @transform_4(%arg0: i32) -> (i32, i32) {
    %c0_i32 = arith.constant 0 : i32
    %c0_i32_0 = arith.constant 0 : i32
    %c0_i32_1 = arith.constant 0 : i32
    return %c0_i32, %c0_i32_0 : i32, i32
  }
  func.func @transform_5(%arg0: i32) -> (i32, i32) {
    %c0_i32 = arith.constant 0 : i32
    %c0_i32_0 = arith.constant 0 : i32
    %c0_i32_1 = arith.constant 0 : i32
    return %c0_i32, %c0_i32_0 : i32, i32
  }
  func.func @transform_6(%arg0: i32) -> (i32, i32) {
    %c0_i32 = arith.constant 0 : i32
    %c0_i32_0 = arith.constant 0 : i32
    %c0_i32_1 = arith.constant 0 : i32
    return %c0_i32, %c0_i32_0 : i32, i32
  }
  func.func @transform_7(%arg0: i32) -> (i32, i32) {
    %c0_i32 = arith.constant 0 : i32
    %c0_i32_0 = arith.constant 0 : i32
    return %arg0, %c0_i32 : i32, i32
  }
}

</mosaic_0001>

<llo_original>
// kernel: mlp_forward.1
$region0: #{mlp_forward.1}
  #allocation0 [shape = 'u32[]', space=smem, size = 0x4, offset = 0x4, fixed_abs, tag = 'smem constant byte address 0x4 - core index']
  #allocation1 [shape = 'u32[144,128]{1,0:T(1,128)}', space=vmem, size = 0x12000, scoped, tag = 'internal scratch']
  %s0 = inlined_call_operand.vmem [shape: bf16[8,32], index: 0, kind: input, shape index: {}]
  %s1 = inlined_call_operand.vmem [shape: bf16[32,64], index: 1, kind: input, shape index: {}]
  %s2 = inlined_call_operand.vmem [shape: f32[1,64], index: 2, kind: input, shape index: {}]
  %s3 = inlined_call_operand.vmem [shape: bf16[64,48], index: 3, kind: input, shape index: {}]
  %s4 = inlined_call_operand.vmem [shape: f32[1,48], index: 4, kind: input, shape index: {}]
  %s5 = inlined_call_operand.vmem [shape: bf16[48,16], index: 5, kind: input, shape index: {}]
  %s6 = inlined_call_operand.vmem [shape: f32[1,16], index: 6, kind: input, shape index: {}]
  %s7 = inlined_call_operand.hbm [shape: f32[8,16], index: 7, kind: output, shape index: {}]
  %s8 = sld [smem:[#allocation0]]
  $region38: #{mlp_forward.1} parent=0
    _
  %s10 = ssub.s32 1, %s8
  %s11 = scalar_select 0, %s10, %s8
  $region1: #{mlp_forward.1} parent=0
    #allocation2 [shape = 'u8[4096]{0}', space=vmem, size = 0x1000, scoped, tag = 'output window, operand 0, single buffered']
    #allocation3 [shape = 's32[1]{0}', space=sflag, size = 0x4, scoped, tag = 'scoped memory for mlp_forward.1']
    %12 = vsyncpa [#allocation3], 0
    // Predicated region
    $region2: #{mlp_forward.1} parent=1 // pred_check
      _
    $region3: #{mlp_forward.1} parent=1 // pred_check_branch
      %14 = sbr.rel (0) target = $region5
    $region4: #{mlp_forward.1} parent=1 // pred_region
      _
    $region5: #{mlp_forward.1} parent=1 // pred_fallthru
      _
    // Predicated region
    $region6: #{mlp_forward.1} parent=1 // pred_check
      _
    $region7: #{mlp_forward.1} parent=1 // pred_check_branch
      %16 = sbr.rel (0) target = $region9
    $region8: #{mlp_forward.1} parent=1 // pred_region
      _
    $region9: #{mlp_forward.1} parent=1 // pred_fallthru
      _
    // Predicated region
    $region10: #{mlp_forward.1} parent=1 // pred_check
      _
    $region11: #{mlp_forward.1} parent=1 // pred_check_branch
      %18 = sbr.rel (0) target = $region13
    $region12: #{mlp_forward.1} parent=1 // pred_region
      _
    $region13: #{mlp_forward.1} parent=1 // pred_fallthru
      _
    // Predicated region
    $region14: #{mlp_forward.1} parent=1 // pred_check
      _
    $region15: #{mlp_forward.1} parent=1 // pred_check_branch
      %20 = sbr.rel (0) target = $region17
    $region16: #{mlp_forward.1} parent=1 // pred_region
      _
    $region17: #{mlp_forward.1} parent=1 // pred_fallthru
      _
    // Predicated region
    $region18: #{mlp_forward.1} parent=1 // pred_check
      _
    $region19: #{mlp_forward.1} parent=1 // pred_check_branch
      %22 = sbr.rel (0) target = $region21
    $region20: #{mlp_forward.1} parent=1 // pred_region
      _
    $region21: #{mlp_forward.1} parent=1 // pred_fallthru
      _
    // Predicated region
    $region22: #{mlp_forward.1} parent=1 // pred_check
      _
    $region23: #{mlp_forward.1} parent=1 // pred_check_branch
      %24 = sbr.rel (0) target = $region25
    $region24: #{mlp_forward.1} parent=1 // pred_region
      _
    $region25: #{mlp_forward.1} parent=1 // pred_fallthru
      _
    // Predicated region
    $region26: #{mlp_forward.1} parent=1 // pred_check
      _
    $region27: #{mlp_forward.1} parent=1 // pred_check_branch
      %26 = sbr.rel (0) target = $region29
    $region28: #{mlp_forward.1} parent=1 // pred_region
      _
    $region29: #{mlp_forward.1} parent=1 // pred_fallthru
      _
    %v28 = vld [vmem:[%s0] sm:$0xf]
    %v29 = vld [vmem:[%s1] sm:$0xf]
    %v30 = vld [vmem:[%s1 + $0x4] sm:$0xf]
    %v31 = vld [vmem:[%s1 + $0x8] sm:$0xf]
    %v32 = vld [vmem:[%s1 + $0xc] sm:$0xf]
    %v33 = vld [vmem:[%s2] sm:$0x1]
    %v35 = vlaneseq
    %v36 = vshrl.u32 %v35, 7
    %v37 = vsub.s32 0, %v36
    %v38 = vrot.slane %v33, %v37
    %v44 = vunpack.c.l.b16 %v29
    %v45 = vunpack.c.l.b16 %v30
    %v46 = vunpack.c.l.b16 %v31
    %v47 = vunpack.c.l.b16 %v32
    %v48 = vpack.c.b16 %v45, %v44
    %v49 = vpack.c.b16 %v47, %v46
    %vm52 = vcmask 261120
    %v54 = vsel %vm52, %v28, 0
    %56 = vmatprep.subr.bf16.mxu0 0
    %57 = vmatpush1.bf16.msra.mxu0 %v48
    %58 = vmatprep.subr.bf16.mxu0 0
    %59 = vmatpush1.bf16.msra.mxu0 %v49
    %60 = vmatprep.subr.bf16.mxu0 0
    %61 = vmatpush1.bf16.msra.mxu0 0
    %62 = vmatprep.subr.bf16.mxu0 0
    %63 = vmatpush1.bf16.msra.mxu0 0
    %64 = vmatprep.subr.bf16.mxu0 0
    %65 = vmatpush1.bf16.msra.mxu0 0
    %66 = vmatprep.subr.bf16.mxu0 0
    %67 = vmatpush1.bf16.msra.mxu0 0
    %68 = vmatprep.subr.bf16.mxu0 0
    %69 = vmatpush1.bf16.msra.mxu0 0
    %70 = vmatprep.subr.bf16.mxu0 0
    %71 = vmatpush1.bf16.msra.mxu0 0
    %72 = vmatprep.subr.bf16.mxu0 0
    %73 = vmatpush1.bf16.msra.mxu0 0
    %74 = vmatprep.subr.bf16.mxu0 0
    %75 = vmatpush1.bf16.msra.mxu0 0
    %76 = vmatprep.subr.bf16.mxu0 0
    %77 = vmatpush1.bf16.msra.mxu0 0
    %78 = vmatprep.subr.bf16.mxu0 0
    %79 = vmatpush1.bf16.msra.mxu0 0
    %80 = vmatprep.subr.bf16.mxu0 0
    %81 = vmatpush1.bf16.msra.mxu0 0
    %82 = vmatprep.subr.bf16.mxu0 0
    %83 = vmatpush1.bf16.msra.mxu0 0
    %84 = vmatprep.subr.bf16.mxu0 0
    %85 = vmatpush1.bf16.msra.mxu0 0
    %86 = vmatprep.subr.bf16.mxu0 0
    %87 = vmatpush1.bf16.msra.mxu0 0
    %88 = vmatprep.mubr.bf16.mxu0 0
    %89 = vmatmul.mubr.bf16.gmra.mrb[0].mxu0 %v54
    %v90 = vpop.f32.mrb[0].mxu0
    %v91 = vadd.f32 %v38, %v90
    %v92 = vpop.f32.mrb[0].mxu0
    %v93 = vpop.f32.mrb[0].mxu0
    %v94 = vpop.f32.mrb[0].mxu0
    %95 = vdwg.mxu0
    %v96 = vtanh.pop %v91
    %v97 = vpack.c.bf16 %v96, %v96
    %v98 = vld [vmem:[%s3] sm:$0xf]
    %v99 = vld [vmem:[%s3 + $0x4] sm:$0xf]
    %v100 = vld [vmem:[%s3 + $0x8] sm:$0xf]
    %v101 = vld [vmem:[%s3 + $0xc] sm:$0xf]
    %v102 = vld [vmem:[%s3 + $0x10] sm:$0xf]
    %v103 = vld [vmem:[%s3 + $0x14] sm:$0xf]
    %v104 = vld [vmem:[%s3 + $0x18] sm:$0xf]
    %v105 = vld [vmem:[%s3 + $0x1c] sm:$0xf]
    %v106 = vld [vmem:[%s4] sm:$0x1]
    %v108 = vlaneseq
    %v109 = vshrl.u32 %v108, 7
    %v110 = vsub.s32 0, %v109
    %v111 = vrot.slane %v106, %v110
    %v121 = vunpack.c.l.b16 %v98
    %v122 = vunpack.c.l.b16 %v99
    %v123 = vunpack.c.l.b16 %v100
    %v124 = vunpack.c.l.b16 %v101
    %v125 = vunpack.c.l.b16 %v102
    %v126 = vunpack.c.l.b16 %v103
    %v127 = vunpack.c.l.b16 %v104
    %v128 = vunpack.c.l.b16 %v105
    %v129 = vpack.c.b16 %v122, %v121
    %v130 = vpack.c.b16 %v124, %v123
    %v131 = vpack.c.b16 %v126, %v125
    %v132 = vpack.c.b16 %v128, %v127
    %vm137 = vcmask 523264
    %v139 = vsel %vm137, %v97, 0
    %141 = vmatprep.subr.bf16.mxu0 0
    %142 = vmatpush1.bf16.msra.mxu0 %v129
    %143 = vmatprep.subr.bf16.mxu0 0
    %144 = vmatpush1.bf16.msra.mxu0 %v130
    %145 = vmatprep.subr.bf16.mxu0 0
    %146 = vmatpush1.bf16.msra.mxu0 %v131
    %147 = vmatprep.subr.bf16.mxu0 0
    %148 = vmatpush1.bf16.msra.mxu0 %v132
    %149 = vmatprep.subr.bf16.mxu0 0
    %150 = vmatpush1.bf16.msra.mxu0 0
    %151 = vmatprep.subr.bf16.mxu0 0
    %152 = vmatpush1.bf16.msra.mxu0 0
    %153 = vmatprep.subr.bf16.mxu0 0
    %154 = vmatpush1.bf16.msra.mxu0 0
    %155 = vmatprep.subr.bf16.mxu0 0
    %156 = vmatpush1.bf16.msra.mxu0 0
    %157 = vmatprep.subr.bf16.mxu0 0
    %158 = vmatpush1.bf16.msra.mxu0 0
    %159 = vmatprep.subr.bf16.mxu0 0
    %160 = vmatpush1.bf16.msra.mxu0 0
    %161 = vmatprep.subr.bf16.mxu0 0
    %162 = vmatpush1.bf16.msra.mxu0 0
    %163 = vmatprep.subr.bf16.mxu0 0
    %164 = vmatpush1.bf16.msra.mxu0 0
    %165 = vmatprep.subr.bf16.mxu0 0
    %166 = vmatpush1.bf16.msra.mxu0 0
    %167 = vmatprep.subr.bf16.mxu0 0
    %168 = vmatpush1.bf16.msra.mxu0 0
    %169 = vmatprep.subr.bf16.mxu0 0
    %170 = vmatpush1.bf16.msra.mxu0 0
    %171 = vmatprep.subr.bf16.mxu0 0
    %172 = vmatpush1.bf16.msra.mxu0 0
    %173 = vmatprep.mubr.bf16.mxu0 0
    %174 = vmatmul.mubr.bf16.gmra.mrb[0].mxu0 %v139
    %v175 = vpop.f32.mrb[0].mxu0
    %v176 = vadd.f32 %v111, %v175
    %v177 = vpop.f32.mrb[0].mxu0
    %v178 = vpop.f32.mrb[0].mxu0
    %v179 = vpop.f32.mrb[0].mxu0
    %180 = vdwg.mxu0
    %v181 = vtanh.pop %v176
    %v182 = vpack.c.bf16 %v181, %v181
    %v183 = vld [vmem:[%s5] sm:$0xf]
    %v184 = vld [vmem:[%s5 + $0x4] sm:$0xf]
    %v185 = vld [vmem:[%s5 + $0x8] sm:$0xf]
    %v186 = vld [vmem:[%s5 + $0xc] sm:$0xf]
    %v187 = vld [vmem:[%s5 + $0x10] sm:$0xf]
    %v188 = vld [vmem:[%s5 + $0x14] sm:$0xf]
    %v189 = vld [vmem:[%s6] sm:$0x1]
    %v191 = vlaneseq
    %v192 = vshrl.u32 %v191, 7
    %v193 = vsub.s32 0, %v192
    %v194 = vrot.slane %v189, %v193
    %v202 = vunpack.c.l.b16 %v183
    %v203 = vunpack.c.l.b16 %v184
    %v204 = vunpack.c.l.b16 %v185
    %v205 = vunpack.c.l.b16 %v186
    %v206 = vunpack.c.l.b16 %v187
    %v207 = vunpack.c.l.b16 %v188
    %v208 = vpack.c.b16 %v203, %v202
    %v209 = vpack.c.b16 %v205, %v204
    %v210 = vpack.c.b16 %v207, %v206
    %vm214 = vcmask 392192
    %v216 = vsel %vm214, %v182, 0
    %218 = vmatprep.subr.bf16.mxu0 0
    %219 = vmatpush1.bf16.msra.mxu0 %v208
    %220 = vmatprep.subr.bf16.mxu0 0
    %221 = vmatpush1.bf16.msra.mxu0 %v209
    %222 = vmatprep.subr.bf16.mxu0 0
    %223 = vmatpush1.bf16.msra.mxu0 %v210
    %224 = vmatprep.subr.bf16.mxu0 0
    %225 = vmatpush1.bf16.msra.mxu0 0
    %226 = vmatprep.subr.bf16.mxu0 0
    %227 = vmatpush1.bf16.msra.mxu0 0
    %228 = vmatprep.subr.bf16.mxu0 0
    %229 = vmatpush1.bf16.msra.mxu0 0
    %230 = vmatprep.subr.bf16.mxu0 0
    %231 = vmatpush1.bf16.msra.mxu0 0
    %232 = vmatprep.subr.bf16.mxu0 0
    %233 = vmatpush1.bf16.msra.mxu0 0
    %234 = vmatprep.subr.bf16.mxu0 0
    %235 = vmatpush1.bf16.msra.mxu0 0
    %236 = vmatprep.subr.bf16.mxu0 0
    %237 = vmatpush1.bf16.msra.mxu0 0
    %238 = vmatprep.subr.bf16.mxu0 0
    %239 = vmatpush1.bf16.msra.mxu0 0
    %240 = vmatprep.subr.bf16.mxu0 0
    %241 = vmatpush1.bf16.msra.mxu0 0
    %242 = vmatprep.subr.bf16.mxu0 0
    %243 = vmatpush1.bf16.msra.mxu0 0
    %244 = vmatprep.subr.bf16.mxu0 0
    %245 = vmatpush1.bf16.msra.mxu0 0
    %246 = vmatprep.subr.bf16.mxu0 0
    %247 = vmatpush1.bf16.msra.mxu0 0
    %248 = vmatprep.subr.bf16.mxu0 0
    %249 = vmatpush1.bf16.msra.mxu0 0
    %250 = vmatprep.mubr.bf16.mxu0 0
    %251 = vmatmul.mubr.bf16.gmra.mrb[0].mxu0 %v216
    %v252 = vpop.f32.mrb[0].mxu0
    %v253 = vadd.f32 %v194, %v252
    %v254 = vpop.f32.mrb[0].mxu0
    %v255 = vpop.f32.mrb[0].mxu0
    %v256 = vpop.f32.mrb[0].mxu0
    %257 = vdwg.mxu0
    %vm258 = vcmask 130048
    %259 = vst.msk [vmem:[#allocation2] sm:$0xff] %vm258, %v253
    // Predicated region
    $region30: #{mlp_forward.1} parent=1 // pred_check
      _
    $region31: #{mlp_forward.1} parent=1 // pred_check_branch
      %261 = sbr.rel (0) target = $region33
    $region32: #{mlp_forward.1} parent=1 // pred_region
      %s263 = ssub.s32 128, 128
      %264 = vsyncadd [#allocation3], %s263
      %s266 = sshll.u32 [#allocation2], 4
      %s267 = int_to_ptr.vmem [resolvable:$true] %s266
      %269 = dma.vmem_to_hbm [thread:$0]  %s267, 128, %s7, [#allocation3]
    $region33: #{mlp_forward.1} parent=1 // pred_fallthru
      _
    // Predicated region
    $region34: #{mlp_forward.1} parent=1 // pred_check
      _
    $region35: #{mlp_forward.1} parent=1 // pred_check_branch
      %271 = sbr.rel (0) target = $region37
    $region36: #{mlp_forward.1} parent=1 // pred_region
      %272 = dma.done [#allocation3], 128
    $region37: #{mlp_forward.1} parent=1 // pred_fallthru
      _
    %273 = vsyncpa [#allocation3], 1

</llo_original>
